<compile_context>
chip_gen: v7x
topology: tpu7x:2x2x1
jax: 0.10.0
libtpu: 0.0.40
codegen_flags: <defaults>
</compile_context>

<pallas_src>
import functools

import jax
import jax.numpy as jnp
from jax import lax
from jax.experimental import pallas as pl
from jax.experimental.pallas import tpu as pltpu

_LANE = 128
_SUBLANE = 8


def _round_up(n, m):
    return ((n + m - 1) // m) * m


def _dropout_keep_mask(shape, row_offset, seed):
    """Keep-mask with P(keep)=1/2 from a murmur3-style hash of the *global*
    element index, so the mask is independent of the batch tiling."""
    rows = lax.broadcasted_iota(jnp.int32, shape, 0) + row_offset
    cols = lax.broadcasted_iota(jnp.int32, shape, 1)
    z = (rows * jnp.int32(shape[1]) + cols).astype(jnp.uint32)
    z = z + seed.astype(jnp.uint32) * jnp.uint32(0x9E3779B9)
    z = z ^ (z >> 16)
    z = z * jnp.uint32(0x85EBCA6B)
    z = z ^ (z >> 13)
    z = z * jnp.uint32(0xC2B2AE35)
    z = z ^ (z >> 16)
    return (z >> 31) == 0  # top bit -> keep with probability exactly 1/2


def _simple_nn_kernel(training, block_rows, seed_ref,
                      x_ref, w1_ref, b1_ref, w2_ref, b2_ref, o_ref):
    # fc1 on the MXU: bf16 operands, f32 accumulation.
    h = jnp.dot(x_ref[...], w1_ref[...], preferred_element_type=jnp.float32)
    # bias + ReLU in f32 on the VPU.
    h = jnp.maximum(h + b1_ref[...], 0.0)
    if training:
        row0 = pl.program_id(0) * block_rows        # per-tile seeding via global row idx
        keep = _dropout_keep_mask(h.shape, row0, seed_ref[0])
        h = jnp.where(keep, h * 2.0, 0.0)           # p=0.5, kept values scaled by 1/(1-p)
    # fc2 on the MXU.
    out = jnp.dot(h.astype(w2_ref.dtype), w2_ref[...],
                  preferred_element_type=jnp.float32)
    o_ref[...] = (out + b2_ref[...]).astype(o_ref.dtype)


def prepare_params(w1, b1, w2, b2, *, compute_dtype=jnp.bfloat16):
    """Canonicalize PyTorch-layout params ONCE (hoisted out of the forward path).

    w1: [hidden, in]  w2: [out, hidden]  (nn.Linear layout) ->
      w1c: [in_p, hid_p] bf16, w2c: [hid_p, out_p] bf16, biases [1, N_p] f32,
      where every dim is padded up to a multiple of 128 lanes.
    """
    in_f, hid, out_f = w1.shape[1], w1.shape[0], w2.shape[0]
    in_p, hid_p, out_p = (_round_up(in_f, _LANE), _round_up(hid, _LANE),
                          _round_up(out_f, _LANE))
    w1c = jnp.zeros((in_p, hid_p), compute_dtype).at[:in_f, :hid].set(
        jnp.transpose(w1).astype(compute_dtype))
    w2c = jnp.zeros((hid_p, out_p), compute_dtype).at[:hid, :out_f].set(
        jnp.transpose(w2).astype(compute_dtype))
    b1c = jnp.zeros((1, hid_p), jnp.float32).at[0, :hid].set(b1.astype(jnp.float32))
    b2c = jnp.zeros((1, out_p), jnp.float32).at[0, :out_f].set(b2.astype(jnp.float32))
    return {"w1": w1c, "b1": b1c, "w2": w2c, "b2": b2c, "out_features": out_f}


@functools.partial(jax.jit,
                   static_argnames=("out_features", "training", "block_rows"))
def _forward(x, w1, b1, w2, b2, seed, *, out_features, training, block_rows):
    B, in_f = x.shape
    in_p, hid_p = w1.shape
    out_p = w2.shape[1]

    # Batch tile: big (up to block_rows), multiple of 8 sublanes.
    tb = max(_SUBLANE, min(_round_up(B, _SUBLANE), block_rows))
    b_pad = _round_up(B, tb)
    grid = (b_pad // tb,)

    # Pad x (batch + features) to the kernel layout; fuses under jit.
    xp = jnp.zeros((b_pad, in_p), w1.dtype).at[:B, :in_f].set(x.astype(w1.dtype))

    kernel = functools.partial(_simple_nn_kernel, training, tb)

    bytes_accessed = (xp.size * xp.dtype.itemsize
                      + w1.size * w1.dtype.itemsize + w2.size * w2.dtype.itemsize
                      + (b1.size + b2.size) * 4
                      + b_pad * out_p * 4)
    cost = pl.CostEstimate(
        flops=2 * b_pad * (in_p * hid_p + hid_p * out_p),
        transcendentals=0,
        bytes_accessed=int(bytes_accessed),
    )
    # VMEM: resident weights/biases + double-buffered x/out tiles + hidden tile + slack.
    vmem_bytes = (w1.size * w1.dtype.itemsize + w2.size * w2.dtype.itemsize
                  + (b1.size + b2.size) * 4
                  + 2 * tb * (in_p * w1.dtype.itemsize + out_p * 4)
                  + tb * hid_p * 4 + (4 << 20))
    vmem_bytes = int(min(vmem_bytes, 100 << 20))

    out = pl.pallas_call(
        kernel,
        out_shape=jax.ShapeDtypeStruct((b_pad, out_p), jnp.float32),
        grid=grid,
        in_specs=[
            pl.BlockSpec(memory_space=pltpu.MemorySpace.SMEM),      # seed scalar
            pl.BlockSpec((tb, in_p), lambda i: (i, 0)),             # x tile (pipelined)
            pl.BlockSpec((in_p, hid_p), lambda i: (0, 0)),          # w1 (VMEM-resident)
            pl.BlockSpec((1, hid_p), lambda i: (0, 0)),             # b1
            pl.BlockSpec((hid_p, out_p), lambda i: (0, 0)),         # w2
            pl.BlockSpec((1, out_p), lambda i: (0, 0)),             # b2
        ],
        out_specs=pl.BlockSpec((tb, out_p), lambda i: (i, 0)),      # lane-dense store
        compiler_params=pltpu.CompilerParams(
            dimension_semantics=("parallel",),
            vmem_limit_bytes=vmem_bytes,
        ),
        cost_estimate=cost,
    )(jnp.asarray(seed, jnp.int32).reshape((1,)), xp, w1, b1, w2, b2)

    return out[:B, :out_features]


def simple_nn_forward(x, params, *, seed=0, training=True, block_rows=512):
    """Forward pass of SimpleNN. `params` comes from prepare_params()."""
    return _forward(x, params["w1"], params["b1"], params["w2"], params["b2"],
                    jnp.int32(seed),
                    out_features=params["out_features"],
                    training=training, block_rows=block_rows)


def init_params(key, input_size, hidden_size, output_size):
    """Matches the module: weights via kaiming_uniform_ (defaults -> bound = sqrt(6/fan_in)),
    biases keep the nn.Linear default U(-1/sqrt(fan_in), 1/sqrt(fan_in))."""
    k1, k2, k3, k4 = jax.random.split(key, 4)

    def kaiming_uniform(k, out_f, in_f):
        bound = jnp.sqrt(6.0 / in_f)
        return jax.random.uniform(k, (out_f, in_f), jnp.float32, -bound, bound)

    def bias_init(k, out_f, in_f):
        bound = 1.0 / jnp.sqrt(in_f)
        return jax.random.uniform(k, (out_f,), jnp.float32, -bound, bound)

    w1 = kaiming_uniform(k1, hidden_size, input_size)
    b1 = bias_init(k2, hidden_size, input_size)
    w2 = kaiming_uniform(k3, output_size, hidden_size)
    b2 = bias_init(k4, output_size, hidden_size)
    return w1, b1, w2, b2


if __name__ == "__main__":
    input_size, hidden_size, output_size = 32, 64, 16
    batch = 8

    key = jax.random.PRNGKey(0)
    kx, kp = jax.random.split(key)
    x = jax.random.normal(kx, (batch, input_size), dtype=jnp.float32)
    w1, b1, w2, b2 = init_params(kp, input_size, hidden_size, output_size)
    params = prepare_params(w1, b1, w2, b2)

    # Training-mode run (dropout active).
    out = jax.block_until_ready(simple_nn_forward(x, params, seed=0, training=True))
    assert out.shape == (batch, output_size), out.shape
    assert bool(jnp.all(jnp.isfinite(out)))

    # Eval-mode check against a plain-JAX reference using the same bf16 MXU operands.
    out_eval = jax.block_until_ready(simple_nn_forward(x, params, training=False))
    cd = params["w1"].dtype
    xp = jnp.zeros((batch, params["w1"].shape[0]), cd).at[:, :input_size].set(x.astype(cd))
    h = jnp.dot(xp, params["w1"], preferred_element_type=jnp.float32) + params["b1"]
    h = jnp.maximum(h, 0.0)
    ref = jnp.dot(h.astype(cd), params["w2"], preferred_element_type=jnp.float32) + params["b2"]
    ref = ref[:, :output_size]
    assert jnp.allclose(out_eval, ref, atol=1e-3, rtol=1e-3), \
        float(jnp.max(jnp.abs(out_eval - ref)))

    print("KERNEL_OK")
</pallas_src>

<mosaic_0001>
module attributes {stable_mosaic.version = 11 : i64} {
  func.func @_simple_nn_kernel(%arg0: i32, %arg1: memref<1xi32, #tpu.memory_space<smem>>, %arg2: memref<8x128xbf16, #tpu.memory_space<vmem>>, %arg3: memref<128x128xbf16, #tpu.memory_space<vmem>>, %arg4: memref<1x128xf32, #tpu.memory_space<vmem>>, %arg5: memref<128x128xbf16, #tpu.memory_space<vmem>>, %arg6: memref<1x128xf32, #tpu.memory_space<vmem>>, %arg7: memref<8x128xf32, #tpu.memory_space<vmem>>) attributes {dimension_semantics = [#tpu.dimension_semantics<parallel>], iteration_bounds = array<i64: 1>, scalar_prefetch = 0 : i64, scratch_operands = 0 : i64, tpu.core_type = #tpu.core_type<tc>, window_params = [{transform_indices = @transform_0, window_bounds = array<i64: 1>}, {transform_indices = @transform_1, window_bounds = array<i64: 8, 128>}, {pipeline_mode = #tpu.pipeline_mode<synchronous>, transform_indices = @transform_2, window_bounds = array<i64: 128, 128>}, {pipeline_mode = #tpu.pipeline_mode<synchronous>, transform_indices = @transform_3, window_bounds = array<i64: 1, 128>}, {pipeline_mode = #tpu.pipeline_mode<synchronous>, transform_indices = @transform_4, window_bounds = array<i64: 128, 128>}, {pipeline_mode = #tpu.pipeline_mode<synchronous>, transform_indices = @transform_5, window_bounds = array<i64: 1, 128>}, {transform_indices = @transform_6, window_bounds = array<i64: 8, 128>}]} {
    %c0 = arith.constant 0 : index
    %c0_0 = arith.constant 0 : index
    %0 = vector.load %arg2[%c0, %c0_0] : memref<8x128xbf16, #tpu.memory_space<vmem>>, vector<8x128xbf16>
    %c0_1 = arith.constant 0 : index
    %c0_2 = arith.constant 0 : index
    %1 = vector.load %arg3[%c0_1, %c0_2] : memref<128x128xbf16, #tpu.memory_space<vmem>>, vector<128x128xbf16>
    %cst = arith.constant dense<0.000000e+00> : vector<8x128xf32>
    %2 = tpu.matmul %0, %1, %cst {dimension_numbers = #tpu.dot_dimension_numbers<[1], [0], [0], [1], [0, 0, 1, 1], [], []>} : vector<8x128xbf16>, vector<128x128xbf16>, vector<8x128xf32> -> vector<8x128xf32>
    %c0_3 = arith.constant 0 : index
    %c0_4 = arith.constant 0 : index
    %3 = vector.load %arg4[%c0_3, %c0_4] : memref<1x128xf32, #tpu.memory_space<vmem>>, vector<1x128xf32>
    %4 = vector.broadcast %3 : vector<1x128xf32> to vector<8x128xf32>
    %5 = arith.addf %2, %4 : vector<8x128xf32>
    %cst_5 = arith.constant 0.000000e+00 : f32
    %6 = vector.broadcast %cst_5 : f32 to vector<8x128xf32>
    %7 = arith.maximumf %5, %6 : vector<8x128xf32>
    %c8_i32 = arith.constant 8 : i32
    %8 = arith.muli %arg0, %c8_i32 : i32
    %c0_6 = arith.constant 0 : index
    %9 = memref.load %arg1[%c0_6] : memref<1xi32, #tpu.memory_space<smem>>
    %10 = tpu.iota {dimensions = array<i32: 0>} : vector<8x128xi32>
    %11 = vector.broadcast %8 : i32 to vector<8x128xi32>
    %12 = arith.addi %10, %11 : vector<8x128xi32>
    %13 = tpu.iota {dimensions = array<i32: 1>} : vector<8x128xi32>
    %c128_i32 = arith.constant 128 : i32
    %14 = vector.broadcast %c128_i32 : i32 to vector<8x128xi32>
    %15 = arith.muli %12, %14 : vector<8x128xi32>
    %16 = arith.addi %15, %13 : vector<8x128xi32>
    %c-1640531527_i32 = arith.constant -1640531527 : i32
    %17 = arith.muli %9, %c-1640531527_i32 : i32
    %18 = vector.broadcast %17 : i32 to vector<8x128xi32>
    %19 = arith.addi %16, %18 : vector<8x128xi32>
    %c16_i32 = arith.constant 16 : i32
    %20 = vector.broadcast %c16_i32 : i32 to vector<8x128xi32>
    %21 = arith.shrui %19, %20 : vector<8x128xi32>
    %22 = arith.xori %19, %21 : vector<8x128xi32>
    %c-2048144789_i32 = arith.constant -2048144789 : i32
    %23 = vector.broadcast %c-2048144789_i32 : i32 to vector<8x128xi32>
    %24 = arith.muli %22, %23 : vector<8x128xi32>
    %c13_i32 = arith.constant 13 : i32
    %25 = vector.broadcast %c13_i32 : i32 to vector<8x128xi32>
    %26 = arith.shrui %24, %25 : vector<8x128xi32>
    %27 = arith.xori %24, %26 : vector<8x128xi32>
    %c-1028477387_i32 = arith.constant -1028477387 : i32
    %28 = vector.broadcast %c-1028477387_i32 : i32 to vector<8x128xi32>
    %29 = arith.muli %27, %28 : vector<8x128xi32>
    %c16_i32_7 = arith.constant 16 : i32
    %30 = vector.broadcast %c16_i32_7 : i32 to vector<8x128xi32>
    %31 = arith.shrui %29, %30 : vector<8x128xi32>
    %32 = arith.xori %29, %31 : vector<8x128xi32>
    %c31_i32 = arith.constant 31 : i32
    %33 = vector.broadcast %c31_i32 : i32 to vector<8x128xi32>
    %34 = arith.shrui %32, %33 : vector<8x128xi32>
    %c0_i32 = arith.constant 0 : i32
    %35 = vector.broadcast %c0_i32 : i32 to vector<8x128xi32>
    %36 = arith.cmpi eq, %34, %35 : vector<8x128xi32>
    %cst_8 = arith.constant 2.000000e+00 : f32
    %37 = vector.broadcast %cst_8 : f32 to vector<8x128xf32>
    %38 = arith.mulf %7, %37 : vector<8x128xf32>
    %cst_9 = arith.constant 0.000000e+00 : f32
    %39 = vector.broadcast %cst_9 : f32 to vector<8x128xf32>
    %40 = arith.select %36, %38, %39 : vector<8x128xi1>, vector<8x128xf32>
    %41 = arith.truncf %40 : vector<8x128xf32> to vector<8x128xbf16>
    %c0_10 = arith.constant 0 : index
    %c0_11 = arith.constant 0 : index
    %42 = vector.load %arg5[%c0_10, %c0_11] : memref<128x128xbf16, #tpu.memory_space<vmem>>, vector<128x128xbf16>
    %cst_12 = arith.constant dense<0.000000e+00> : vector<8x128xf32>
    %43 = tpu.matmul %41, %42, %cst_12 {dimension_numbers = #tpu.dot_dimension_numbers<[1], [0], [0], [1], [0, 0, 1, 1], [], []>} : vector<8x128xbf16>, vector<128x128xbf16>, vector<8x128xf32> -> vector<8x128xf32>
    %c0_13 = arith.constant 0 : index
    %c0_14 = arith.constant 0 : index
    %44 = vector.load %arg6[%c0_13, %c0_14] : memref<1x128xf32, #tpu.memory_space<vmem>>, vector<1x128xf32>
    %45 = vector.broadcast %44 : vector<1x128xf32> to vector<8x128xf32>
    %46 = arith.addf %43, %45 : vector<8x128xf32>
    %c0_15 = arith.constant 0 : index
    %c0_16 = arith.constant 0 : index
    %47 = vector.load %arg7[%c0_15, %c0_16] : memref<8x128xf32, #tpu.memory_space<vmem>>, vector<8x128xf32>
    tpu.vector_store %arg7[%c0_15, %c0_16], %46 {strides = array<i32>} : memref<8x128xf32, #tpu.memory_space<vmem>>, vector<8x128xf32>,
    return
  }
  func.func @transform_0(%arg0: i32) -> i32 {
    %c0_i32 = arith.constant 0 : i32
    %c0_i32_0 = arith.constant 0 : i32
    return %c0_i32 : i32
  }
  func.func @transform_1(%arg0: i32) -> (i32, i32) {
    %c0_i32 = arith.constant 0 : i32
    %c0_i32_0 = arith.constant 0 : i32
    return %arg0, %c0_i32 : i32, i32
  }
  func.func @transform_2(%arg0: i32) -> (i32, i32) {
    %c0_i32 = arith.constant 0 : i32
    %c0_i32_0 = arith.constant 0 : i32
    %c0_i32_1 = arith.constant 0 : i32
    return %c0_i32, %c0_i32_0 : i32, i32
  }
  func.func @transform_3(%arg0: i32) -> (i32, i32) {
    %c0_i32 = arith.constant 0 : i32
    %c0_i32_0 = arith.constant 0 : i32
    %c0_i32_1 = arith.constant 0 : i32
    return %c0_i32, %c0_i32_0 : i32, i32
  }
  func.func @transform_4(%arg0: i32) -> (i32, i32) {
    %c0_i32 = arith.constant 0 : i32
    %c0_i32_0 = arith.constant 0 : i32
    %c0_i32_1 = arith.constant 0 : i32
    return %c0_i32, %c0_i32_0 : i32, i32
  }
  func.func @transform_5(%arg0: i32) -> (i32, i32) {
    %c0_i32 = arith.constant 0 : i32
    %c0_i32_0 = arith.constant 0 : i32
    %c0_i32_1 = arith.constant 0 : i32
    return %c0_i32, %c0_i32_0 : i32, i32
  }
  func.func @transform_6(%arg0: i32) -> (i32, i32) {
    %c0_i32 = arith.constant 0 : i32
    %c0_i32_0 = arith.constant 0 : i32
    return %arg0, %c0_i32 : i32, i32
  }
}

</mosaic_0001>

<llo_original>
// kernel: _forward.1
$region0: #{_forward.1}
  #allocation0 [shape = 'u32[]', space=smem, size = 0x4, offset = 0x4, fixed_abs, tag = 'smem constant byte address 0x4 - core index']
  #allocation1 [shape = 'u32[144,128]{1,0:T(1,128)}', space=vmem, size = 0x12000, scoped, tag = 'internal scratch']
  #allocation2 [shape = 's32[1]{0:T(128)S(6)}', space=smem, size = 0x200, scoped, tag = 'scoped memory for _forward.1']
  %s0 = inlined_call_operand.<no memory space> [shape: s32[1], index: 0, kind: input, shape index: {}]
  %s1 = inlined_call_operand.vmem [shape: bf16[8,128], index: 1, kind: input, shape index: {}]
  %s2 = inlined_call_operand.hbm [shape: bf16[128,128], index: 2, kind: input, shape index: {}]
  %s3 = inlined_call_operand.vmem [shape: f32[1,128], index: 3, kind: input, shape index: {}]
  %s4 = inlined_call_operand.hbm [shape: bf16[128,128], index: 4, kind: input, shape index: {}]
  %s5 = inlined_call_operand.vmem [shape: f32[1,128], index: 5, kind: input, shape index: {}]
  %s6 = inlined_call_operand.hbm [shape: f32[8,128], index: 6, kind: output, shape index: {}]
  %s7 = sld [smem:[#allocation0]]
  $region42: #{_forward.1} parent=0
    _
  %s9 = ssub.s32 1, %s7
  %s10 = scalar_select 0, %s9, %s7
  %11 = sst [smem:[#allocation2]] %s0
  $region1: #{_forward.1} parent=0
    #allocation3 [shape = 'u8[32768]{0}', space=vmem, size = 0x8000, scoped, tag = 'input window, operand 2, single buffered']
    #allocation4 [shape = 's32[1]{0}', space=sflag, size = 0x4, scoped, tag = 'scoped memory for _forward.1']
    #allocation5 [shape = 's32[1]{0}', space=sflag, size = 0x4, scoped, tag = 'scoped memory for _forward.1']
    #allocation6 [shape = 'u8[32768]{0}', space=vmem, size = 0x8000, scoped, tag = 'input window, operand 4, single buffered']
    #allocation7 [shape = 's32[1]{0}', space=sflag, size = 0x4, scoped, tag = 'scoped memory for _forward.1']
    #allocation8 [shape = 'u8[4096]{0}', space=vmem, size = 0x1000, scoped, tag = 'output window, operand 0, single buffered']
    %12 = vsyncpa [#allocation4], 0
    %13 = vsyncpa [#allocation7], 0
    %14 = vsyncpa [#allocation5], 0
    // Predicated region
    $region2: #{_forward.1} parent=1 // pred_check
      _
    $region3: #{_forward.1} parent=1 // pred_check_branch
      %16 = sbr.rel (0) target = $region5
    $region4: #{_forward.1} parent=1 // pred_region
      _
    $region5: #{_forward.1} parent=1 // pred_fallthru
      _
    // Predicated region
    $region6: #{_forward.1} parent=1 // pred_check
      _
    $region7: #{_forward.1} parent=1 // pred_check_branch
      %18 = sbr.rel (0) target = $region9
    $region8: #{_forward.1} parent=1 // pred_region
      _
    $region9: #{_forward.1} parent=1 // pred_fallthru
      _
    // Predicated region
    $region10: #{_forward.1} parent=1 // pred_check
      _
    $region11: #{_forward.1} parent=1 // pred_check_branch
      %20 = sbr.rel (0) target = $region13
    $region12: #{_forward.1} parent=1 // pred_region
      %s22 = ssub.s32 1024, 1024
      %23 = vsyncadd [#allocation4], %s22
      %s24 = sshll.u32 [#allocation3], 4
      %s25 = int_to_ptr.vmem [resolvable:$true] %s24
      %30 = dma.hbm_to_vmem [thread:$0]  %s2, 1024, %s25, [#allocation4], 64, 64, 4
    $region13: #{_forward.1} parent=1 // pred_fallthru
      _
    // Predicated region
    $region14: #{_forward.1} parent=1 // pred_check
      _
    $region15: #{_forward.1} parent=1 // pred_check_branch
      %32 = sbr.rel (0) target = $region17
    $region16: #{_forward.1} parent=1 // pred_region
      _
    $region17: #{_forward.1} parent=1 // pred_fallthru
      _
    // Predicated region
    $region18: #{_forward.1} parent=1 // pred_check
      _
    $region19: #{_forward.1} parent=1 // pred_check_branch
      %34 = sbr.rel (0) target = $region21
    $region20: #{_forward.1} parent=1 // pred_region
      %s36 = ssub.s32 1024, 1024
      %37 = vsyncadd [#allocation7], %s36
      %s38 = sshll.u32 [#allocation6], 4
      %s39 = int_to_ptr.vmem [resolvable:$true] %s38
      %44 = dma.hbm_to_vmem [thread:$0]  %s4, 1024, %s39, [#allocation7], 64, 64, 4
    $region21: #{_forward.1} parent=1 // pred_fallthru
      _
    // Predicated region
    $region22: #{_forward.1} parent=1 // pred_check
      _
    $region23: #{_forward.1} parent=1 // pred_check_branch
      %46 = sbr.rel (0) target = $region25
    $region24: #{_forward.1} parent=1 // pred_region
      _
    $region25: #{_forward.1} parent=1 // pred_fallthru
      _
    // Predicated region
    $region26: #{_forward.1} parent=1 // pred_check
      _
    $region27: #{_forward.1} parent=1 // pred_check_branch
      %48 = sbr.rel (0) target = $region29
    $region28: #{_forward.1} parent=1 // pred_region
      %49 = dma.done [#allocation4], 1024
    $region29: #{_forward.1} parent=1 // pred_fallthru
      _
    // Predicated region
    $region30: #{_forward.1} parent=1 // pred_check
      _
    $region31: #{_forward.1} parent=1 // pred_check_branch
      %51 = sbr.rel (0) target = $region33
    $region32: #{_forward.1} parent=1 // pred_region
      %52 = dma.done [#allocation7], 1024
    $region33: #{_forward.1} parent=1 // pred_fallthru
      _
    %v54 = vld [vmem:[%s1] sm:$0xf]
    %v55 = vld [vmem:[#allocation3] sm:$0xf]
    %v56 = vld [vmem:[#allocation3 + $0x4] sm:$0xf]
    %v57 = vld [vmem:[#allocation3 + $0x8] sm:$0xf]
    %v58 = vld [vmem:[#allocation3 + $0xc] sm:$0xf]
    %v59 = vld [vmem:[#allocation3 + $0x10] sm:$0xf]
    %v60 = vld [vmem:[#allocation3 + $0x14] sm:$0xf]
    %v61 = vld [vmem:[#allocation3 + $0x18] sm:$0xf]
    %v62 = vld [vmem:[#allocation3 + $0x1c] sm:$0xf]
    %v63 = vld [vmem:[#allocation3 + $0x20] sm:$0xf]
    %v64 = vld [vmem:[#allocation3 + $0x24] sm:$0xf]
    %v65 = vld [vmem:[#allocation3 + $0x28] sm:$0xf]
    %v66 = vld [vmem:[#allocation3 + $0x2c] sm:$0xf]
    %v67 = vld [vmem:[#allocation3 + $0x30] sm:$0xf]
    %v68 = vld [vmem:[#allocation3 + $0x34] sm:$0xf]
    %v69 = vld [vmem:[#allocation3 + $0x38] sm:$0xf]
    %v70 = vld [vmem:[#allocation3 + $0x3c] sm:$0xf]
    %v71 = vld [vmem:[%s3] sm:$0x1]
    %v73 = vlaneseq
    %v74 = vshrl.u32 %v73, 7
    %v75 = vsub.s32 0, %v74
    %v76 = vrot.slane %v71, %v75
    %v94 = vunpack.c.l.b16 %v55
    %v95 = vunpack.c.l.b16 %v56
    %v96 = vunpack.c.l.b16 %v57
    %v97 = vunpack.c.l.b16 %v58
    %v98 = vunpack.c.l.b16 %v59
    %v99 = vunpack.c.l.b16 %v60
    %v100 = vunpack.c.l.b16 %v61
    %v101 = vunpack.c.l.b16 %v62
    %v102 = vunpack.c.l.b16 %v63
    %v103 = vunpack.c.l.b16 %v64
    %v104 = vunpack.c.l.b16 %v65
    %v105 = vunpack.c.l.b16 %v66
    %v106 = vunpack.c.l.b16 %v67
    %v107 = vunpack.c.l.b16 %v68
    %v108 = vunpack.c.l.b16 %v69
    %v109 = vunpack.c.l.b16 %v70
    %v110 = vpack.c.b16 %v95, %v94
    %v111 = vpack.c.b16 %v97, %v96
    %v112 = vpack.c.b16 %v99, %v98
    %v113 = vpack.c.b16 %v101, %v100
    %v114 = vpack.c.b16 %v103, %v102
    %v115 = vpack.c.b16 %v105, %v104
    %v116 = vpack.c.b16 %v107, %v106
    %v117 = vpack.c.b16 %v109, %v108
    %126 = vmatprep.subr.bf16.mxu0 0
    %127 = vmatpush1.bf16.msra.mxu0 %v110
    %128 = vmatprep.subr.bf16.mxu0 0
    %129 = vmatpush1.bf16.msra.mxu0 %v111
    %130 = vmatprep.subr.bf16.mxu0 0
    %131 = vmatpush1.bf16.msra.mxu0 %v112
    %132 = vmatprep.subr.bf16.mxu0 0
    %133 = vmatpush1.bf16.msra.mxu0 %v113
    %134 = vmatprep.subr.bf16.mxu0 0
    %135 = vmatpush1.bf16.msra.mxu0 %v114
    %136 = vmatprep.subr.bf16.mxu0 0
    %137 = vmatpush1.bf16.msra.mxu0 %v115
    %138 = vmatprep.subr.bf16.mxu0 0
    %139 = vmatpush1.bf16.msra.mxu0 %v116
    %140 = vmatprep.subr.bf16.mxu0 0
    %141 = vmatpush1.bf16.msra.mxu0 %v117
    %142 = vmatprep.subr.bf16.mxu0 0
    %143 = vmatpush1.bf16.msra.mxu0 0
    %144 = vmatprep.subr.bf16.mxu0 0
    %145 = vmatpush1.bf16.msra.mxu0 0
    %146 = vmatprep.subr.bf16.mxu0 0
    %147 = vmatpush1.bf16.msra.mxu0 0
    %148 = vmatprep.subr.bf16.mxu0 0
    %149 = vmatpush1.bf16.msra.mxu0 0
    %150 = vmatprep.subr.bf16.mxu0 0
    %151 = vmatpush1.bf16.msra.mxu0 0
    %152 = vmatprep.subr.bf16.mxu0 0
    %153 = vmatpush1.bf16.msra.mxu0 0
    %154 = vmatprep.subr.bf16.mxu0 0
    %155 = vmatpush1.bf16.msra.mxu0 0
    %156 = vmatprep.subr.bf16.mxu0 0
    %157 = vmatpush1.bf16.msra.mxu0 0
    %158 = vmatprep.mubr.bf16.mxu0 0
    %159 = vmatmul.mubr.bf16.gmra.mrb[0].mxu0 %v54
    %v160 = vpop.f32.mrb[0].mxu0
    %v161 = vadd.f32 %v76, %v160
    %v162 = vpop.f32.mrb[0].mxu0
    %v163 = vpop.f32.mrb[0].mxu0
    %v164 = vpop.f32.mrb[0].mxu0
    %165 = vdwg.mxu0
    %v166 = vmax.f32 %v161, 0.0
    %s167 = smul.u32 0, 8
    %s168 = sld [smem:[#allocation2]]
    %v169 = vlaneseq
    %v170 = vshrl.u32 %v169, 7
    %v171 = vstv %s167
    %v172 = vadd.s32 %v170, %v171
    %v173 = vlaneseq
    %v174 = vand.u32 %v173, 127
    %v175 = vmul.u32 %v172, 128
    %v176 = vadd.s32 %v175, %v174
    %s177 = smul.u32 %s168, 2654435769
    %v178 = vstv %s177
    %v179 = vadd.s32 %v176, %v178
    %v180 = vshrl.u32 %v179, 16
    %v181 = vxor.u32 %v179, %v180
    %v182 = vmul.u32 %v181, 2246822507
    %v183 = vshrl.u32 %v182, 13
    %v184 = vxor.u32 %v182, %v183
    %v185 = vmul.u32 %v184, 3266489909
    %v186 = vshrl.u32 %v185, 16
    %v187 = vxor.u32 %v185, %v186
    %v188 = vshrl.u32 %v187, 31
    %vm189 = vcmp.eq.s32.totalorder %v188, 0
    %v190 = vmul.f32 %v166, 2.0
    %v191 = vsel %vm189, %v190, 0.0
    %v192 = vpack.c.bf16 %v191, %v191
    %v193 = vld [vmem:[#allocation6] sm:$0xf]
    %v194 = vld [vmem:[#allocation6 + $0x4] sm:$0xf]
    %v195 = vld [vmem:[#allocation6 + $0x8] sm:$0xf]
    %v196 = vld [vmem:[#allocation6 + $0xc] sm:$0xf]
    %v197 = vld [vmem:[#allocation6 + $0x10] sm:$0xf]
    %v198 = vld [vmem:[#allocation6 + $0x14] sm:$0xf]
    %v199 = vld [vmem:[#allocation6 + $0x18] sm:$0xf]
    %v200 = vld [vmem:[#allocation6 + $0x1c] sm:$0xf]
    %v201 = vld [vmem:[#allocation6 + $0x20] sm:$0xf]
    %v202 = vld [vmem:[#allocation6 + $0x24] sm:$0xf]
    %v203 = vld [vmem:[#allocation6 + $0x28] sm:$0xf]
    %v204 = vld [vmem:[#allocation6 + $0x2c] sm:$0xf]
    %v205 = vld [vmem:[#allocation6 + $0x30] sm:$0xf]
    %v206 = vld [vmem:[#allocation6 + $0x34] sm:$0xf]
    %v207 = vld [vmem:[#allocation6 + $0x38] sm:$0xf]
    %v208 = vld [vmem:[#allocation6 + $0x3c] sm:$0xf]
    %v209 = vld [vmem:[%s5] sm:$0x1]
    %v211 = vlaneseq
    %v212 = vshrl.u32 %v211, 7
    %v213 = vsub.s32 0, %v212
    %v214 = vrot.slane %v209, %v213
    %v232 = vunpack.c.l.b16 %v193
    %v233 = vunpack.c.l.b16 %v194
    %v234 = vunpack.c.l.b16 %v195
    %v235 = vunpack.c.l.b16 %v196
    %v236 = vunpack.c.l.b16 %v197
    %v237 = vunpack.c.l.b16 %v198
    %v238 = vunpack.c.l.b16 %v199
    %v239 = vunpack.c.l.b16 %v200
    %v240 = vunpack.c.l.b16 %v201
    %v241 = vunpack.c.l.b16 %v202
    %v242 = vunpack.c.l.b16 %v203
    %v243 = vunpack.c.l.b16 %v204
    %v244 = vunpack.c.l.b16 %v205
    %v245 = vunpack.c.l.b16 %v206
    %v246 = vunpack.c.l.b16 %v207
    %v247 = vunpack.c.l.b16 %v208
    %v248 = vpack.c.b16 %v233, %v232
    %v249 = vpack.c.b16 %v235, %v234
    %v250 = vpack.c.b16 %v237, %v236
    %v251 = vpack.c.b16 %v239, %v238
    %v252 = vpack.c.b16 %v241, %v240
    %v253 = vpack.c.b16 %v243, %v242
    %v254 = vpack.c.b16 %v245, %v244
    %v255 = vpack.c.b16 %v247, %v246
    %264 = vmatprep.subr.bf16.mxu0 0
    %265 = vmatpush1.bf16.msra.mxu0 %v248
    %266 = vmatprep.subr.bf16.mxu0 0
    %267 = vmatpush1.bf16.msra.mxu0 %v249
    %268 = vmatprep.subr.bf16.mxu0 0
    %269 = vmatpush1.bf16.msra.mxu0 %v250
    %270 = vmatprep.subr.bf16.mxu0 0
    %271 = vmatpush1.bf16.msra.mxu0 %v251
    %272 = vmatprep.subr.bf16.mxu0 0
    %273 = vmatpush1.bf16.msra.mxu0 %v252
    %274 = vmatprep.subr.bf16.mxu0 0
    %275 = vmatpush1.bf16.msra.mxu0 %v253
    %276 = vmatprep.subr.bf16.mxu0 0
    %277 = vmatpush1.bf16.msra.mxu0 %v254
    %278 = vmatprep.subr.bf16.mxu0 0
    %279 = vmatpush1.bf16.msra.mxu0 %v255
    %280 = vmatprep.subr.bf16.mxu0 0
    %281 = vmatpush1.bf16.msra.mxu0 0
    %282 = vmatprep.subr.bf16.mxu0 0
    %283 = vmatpush1.bf16.msra.mxu0 0
    %284 = vmatprep.subr.bf16.mxu0 0
    %285 = vmatpush1.bf16.msra.mxu0 0
    %286 = vmatprep.subr.bf16.mxu0 0
    %287 = vmatpush1.bf16.msra.mxu0 0
    %288 = vmatprep.subr.bf16.mxu0 0
    %289 = vmatpush1.bf16.msra.mxu0 0
    %290 = vmatprep.subr.bf16.mxu0 0
    %291 = vmatpush1.bf16.msra.mxu0 0
    %292 = vmatprep.subr.bf16.mxu0 0
    %293 = vmatpush1.bf16.msra.mxu0 0
    %294 = vmatprep.subr.bf16.mxu0 0
    %295 = vmatpush1.bf16.msra.mxu0 0
    %296 = vmatprep.mubr.bf16.mxu0 0
    %297 = vmatmul.mubr.bf16.gmra.mrb[0].mxu0 %v192
    %v298 = vpop.f32.mrb[0].mxu0
    %v299 = vadd.f32 %v214, %v298
    %v300 = vpop.f32.mrb[0].mxu0
    %v301 = vpop.f32.mrb[0].mxu0
    %v302 = vpop.f32.mrb[0].mxu0
    %303 = vdwg.mxu0
    %304 = vst [vmem:[#allocation8] sm:$0xff] %v299
    // Predicated region
    $region34: #{_forward.1} parent=1 // pred_check
      _
    $region35: #{_forward.1} parent=1 // pred_check_branch
      %306 = sbr.rel (0) target = $region37
    $region36: #{_forward.1} parent=1 // pred_region
      %s308 = ssub.s32 128, 128
      %309 = vsyncadd [#allocation5], %s308
      %s311 = sshll.u32 [#allocation8], 4
      %s312 = int_to_ptr.vmem [resolvable:$true] %s311
      %314 = dma.vmem_to_hbm [thread:$0]  %s312, 128, %s6, [#allocation5]
    $region37: #{_forward.1} parent=1 // pred_fallthru
      _
    // Predicated region
    $region38: #{_forward.1} parent=1 // pred_check
      _
    $region39: #{_forward.1} parent=1 // pred_check_branch
      %316 = sbr.rel (0) target = $region41
    $region40: #{_forward.1} parent=1 // pred_region
      %317 = dma.done [#allocation5], 128
    $region41: #{_forward.1} parent=1 // pred_fallthru
      _
    %318 = vsyncpa [#allocation4], 1
    %319 = vsyncpa [#allocation7], 1
    %320 = vsyncpa [#allocation5], 1

</llo_original>
